<compile_context>
chip_gen: v7x
topology: tpu7x:2x2x1
jax: 0.10.0
libtpu: 0.0.40
codegen_flags: <defaults>
</compile_context>

<pallas_src>
import jax
import jax.numpy as jnp
from jax import lax
from jax.experimental import pallas as pl
from jax.experimental.pallas import tpu as pltpu


def _make_kernel(n_rows, tb, H, W, need_row_mask):
    HW = H * W

    def kernel(x_ref, out_ref):
        x = x_ref[...].astype(jnp.float32)              # (tb, HW)

        # Zero out the ragged tail rows of the last block (if any) so they
        # contribute nothing to the sum.
        if need_row_mask:
            base = pl.program_id(0) * tb
            row = lax.broadcasted_iota(jnp.int32, (tb, 1), 0)
            x = jnp.where(row + base < n_rows, x, 0.0)

        col = lax.broadcasted_iota(jnp.int32, (1, HW), 1)
        jmod = col % W                                   # column within the W axis

        # Vertical neighbors:  f[i+1, j] - f[i, j]  ->  x[k+W] - x[k]
        d = x[:, W:] - x[:, :HW - W]
        s = jnp.sum(d * d)

        # Horizontal neighbors: f[i, j+1] - f[i, j] -> x[k+1] - x[k],  j != W-1
        d = x[:, 1:] - x[:, :HW - 1]
        d = jnp.where(jmod[:, :HW - 1] != W - 1, d, 0.0)
        s += jnp.sum(d * d)

        # Main diagonal: f[i+1, j+1] - f[i, j] -> x[k+W+1] - x[k],  j != W-1
        d = x[:, W + 1:] - x[:, :HW - W - 1]
        d = jnp.where(jmod[:, :HW - W - 1] != W - 1, d, 0.0)
        s += jnp.sum(d * d)

        # Anti-diagonal: f[i+1, j-1] - f[i, j] -> x[k+W-1] - x[k],  j != 0
        d = x[:, W - 1:] - x[:, :HW - W + 1]
        d = jnp.where(jmod[:, :HW - W + 1] != 0, d, 0.0)
        s += jnp.sum(d * d)

        # Each adjacent pair is counted from both endpoints in the reference.
        out_ref[0, 0] = 2.0 * s

    return kernel


def _pick_tb(n_rows, hw, itemsize, target_block_bytes=2 << 20):
    """Rows per grid step: ~2 MiB blocks, multiple of 8 (or the full N)."""
    tb = max(1, target_block_bytes // max(1, hw * itemsize))
    if tb < n_rows:
        tb = max(8, (tb // 8) * 8)
    return min(tb, n_rows)


def laplacian_regularizer_2d(f):
    """f: (B, C, H, W) array (NCHW, same as PyTorch). Returns scalar float32."""
    B, C, H, W = f.shape
    N = B * C
    HW = H * W

    # Free reshape: row-major (B, C, H, W) -> (N, H*W); lane dim is now H*W.
    x = f.reshape(N, HW)
    itemsize = x.dtype.itemsize

    tb = _pick_tb(N, HW, itemsize)
    num_blocks = pl.cdiv(N, tb)
    need_row_mask = (N % tb) != 0

    kernel = _make_kernel(N, tb, H, W, need_row_mask)

    cost = pl.CostEstimate(
        flops=12 * N * HW,               # 4 directions x (sub + mul + add)
        transcendentals=0,
        bytes_accessed=N * HW * itemsize + num_blocks * 4,
    )

    partials = pl.pallas_call(
        kernel,
        out_shape=jax.ShapeDtypeStruct((num_blocks, 1), jnp.float32),
        grid_spec=pltpu.PrefetchScalarGridSpec(
            num_scalar_prefetch=0,
            grid=(num_blocks,),
            in_specs=[pl.BlockSpec((tb, HW), lambda i: (i, 0))],
            out_specs=pl.BlockSpec((1, 1), lambda i: (i, 0),
                                   memory_space=pltpu.SMEM),
        ),
        compiler_params=pltpu.CompilerParams(
            dimension_semantics=("parallel",)),   # independent partials -> megacore
        cost_estimate=cost,
    )(x)

    return jnp.sum(partials)


def _laplacian_reference(f):
    """Pure-JAX reference mirroring the PyTorch double loop (closed form)."""
    f = f.astype(jnp.float32)
    d_h = f[:, :, 1:, :] - f[:, :, :-1, :]
    d_w = f[:, :, :, 1:] - f[:, :, :, :-1]
    d_d = f[:, :, 1:, 1:] - f[:, :, :-1, :-1]
    d_a = f[:, :, 1:, :-1] - f[:, :, :-1, 1:]
    return 2.0 * (jnp.sum(d_h ** 2) + jnp.sum(d_w ** 2)
                  + jnp.sum(d_d ** 2) + jnp.sum(d_a ** 2))


if __name__ == "__main__":
    key = jax.random.PRNGKey(0)
    # LaplacianRegularizer2D has no learnable parameters; only the input f.
    B, C, H, W = 2, 4, 16, 16
    f = jax.random.normal(key, (B, C, H, W), dtype=jnp.float32)

    loss = laplacian_regularizer_2d(f)
    jax.block_until_ready(loss)

    ref = _laplacian_reference(f)
    assert jnp.allclose(loss, ref, rtol=1e-5, atol=1e-4), (loss, ref)
    print("KERNEL_OK")
</pallas_src>

<mosaic_0001>
module attributes {stable_mosaic.version = 11 : i64} {
  func.func @kernel(%arg0: i32, %arg1: memref<8x256xf32, #tpu.memory_space<vmem>>, %arg2: memref<1x1xf32, #tpu.memory_space<smem>>) attributes {dimension_semantics = [#tpu.dimension_semantics<parallel>], iteration_bounds = array<i64: 1>, scalar_prefetch = 0 : i64, scratch_operands = 0 : i64, tpu.core_type = #tpu.core_type<tc>, window_params = [{transform_indices = @transform_0, window_bounds = array<i64: 8, 256>}, {transform_indices = @transform_1, window_bounds = array<i64: 1, 1>}]} {
    %c0 = arith.constant 0 : index
    %c0_0 = arith.constant 0 : index
    %0 = vector.load %arg1[%c0, %c0_0] : memref<8x256xf32, #tpu.memory_space<vmem>>, vector<8x256xf32>
    %1 = tpu.iota {dimensions = array<i32: 1>} : vector<1x256xi32>
    %c16_i32 = arith.constant 16 : i32
    %c0_i32 = arith.constant 0 : i32
    %2 = arith.cmpi eq, %c16_i32, %c0_i32 : i32
    %c1_i32 = arith.constant 1 : i32
    %3 = arith.select %2, %c1_i32, %c16_i32 : i32
    %4 = vector.broadcast %3 : i32 to vector<1x256xi32>
    %5 = arith.remsi %1, %4 : vector<1x256xi32>
    %c0_i32_1 = arith.constant 0 : i32
    %6 = vector.broadcast %c0_i32_1 : i32 to vector<1x256xi32>
    %7 = arith.cmpi ne, %5, %6 : vector<1x256xi32>
    %c0_i32_2 = arith.constant 0 : i32
    %8 = vector.broadcast %c0_i32_2 : i32 to vector<1x256xi32>
    %9 = arith.cmpi slt, %5, %8 : vector<1x256xi32>
    %c0_i32_3 = arith.constant 0 : i32
    %10 = arith.cmpi slt, %3, %c0_i32_3 : i32
    %11 = vector.broadcast %10 : i1 to vector<1x256xi1>
    %12 = vector.broadcast %11 : vector<1x256xi1> to vector<1x256xi1>
    %13 = arith.xori %9, %12 : vector<1x256xi1>
    %14 = arith.andi %13, %7 : vector<1x256xi1>
    %15 = vector.broadcast %3 : i32 to vector<1x256xi32>
    %16 = arith.addi %5, %15 : vector<1x256xi32>
    %17 = arith.select %14, %16, %5 : vector<1x256xi1>, vector<1x256xi32>
    %18 = vector.extract_strided_slice %0 {offsets = [0, 16], sizes = [8, 240], strides = [1, 1]} : vector<8x256xf32> to vector<8x240xf32>
    %19 = vector.extract_strided_slice %0 {offsets = [0, 0], sizes = [8, 240], strides = [1, 1]} : vector<8x256xf32> to vector<8x240xf32>
    %20 = arith.subf %18, %19 : vector<8x240xf32>
    %21 = arith.mulf %20, %20 : vector<8x240xf32>
    %22 = vector.shape_cast %21 : vector<8x240xf32> to vector<1x8x240xf32>
    %cst = arith.constant dense<0.000000e+00> : vector<1xf32>
    %23 = vector.multi_reduction <add>, %22, %cst [1, 2] : vector<1x8x240xf32> to vector<1xf32>
    %24 = vector.shape_cast %23 : vector<1xf32> to vector<1x1x1xf32>
    %25 = vector.extract %24[0, 0, 0] : f32 from vector<1x1x1xf32>
    %26 = vector.extract_strided_slice %0 {offsets = [0, 1], sizes = [8, 255], strides = [1, 1]} : vector<8x256xf32> to vector<8x255xf32>
    %27 = vector.extract_strided_slice %0 {offsets = [0, 0], sizes = [8, 255], strides = [1, 1]} : vector<8x256xf32> to vector<8x255xf32>
    %28 = arith.subf %26, %27 : vector<8x255xf32>
    %29 = vector.extract_strided_slice %17 {offsets = [0, 0], sizes = [1, 255], strides = [1, 1]} : vector<1x256xi32> to vector<1x255xi32>
    %c15_i32 = arith.constant 15 : i32
    %30 = vector.broadcast %c15_i32 : i32 to vector<1x255xi32>
    %31 = arith.cmpi ne, %29, %30 : vector<1x255xi32>
    %cst_4 = arith.constant 0.000000e+00 : f32
    %32 = vector.shape_cast %31 : vector<1x255xi1> to vector<1x255xi1>
    %33 = vector.broadcast %32 : vector<1x255xi1> to vector<8x255xi1>
    %34 = vector.broadcast %cst_4 : f32 to vector<8x255xf32>
    %35 = arith.select %33, %28, %34 : vector<8x255xi1>, vector<8x255xf32>
    %36 = arith.mulf %35, %35 : vector<8x255xf32>
    %37 = vector.shape_cast %36 : vector<8x255xf32> to vector<1x8x255xf32>
    %cst_5 = arith.constant dense<0.000000e+00> : vector<1xf32>
    %38 = vector.multi_reduction <add>, %37, %cst_5 [1, 2] : vector<1x8x255xf32> to vector<1xf32>
    %39 = vector.shape_cast %38 : vector<1xf32> to vector<1x1x1xf32>
    %40 = vector.extract %39[0, 0, 0] : f32 from vector<1x1x1xf32>
    %41 = arith.addf %25, %40 : f32
    %42 = vector.extract_strided_slice %0 {offsets = [0, 17], sizes = [8, 239], strides = [1, 1]} : vector<8x256xf32> to vector<8x239xf32>
    %43 = vector.extract_strided_slice %0 {offsets = [0, 0], sizes = [8, 239], strides = [1, 1]} : vector<8x256xf32> to vector<8x239xf32>
    %44 = arith.subf %42, %43 : vector<8x239xf32>
    %45 = vector.extract_strided_slice %17 {offsets = [0, 0], sizes = [1, 239], strides = [1, 1]} : vector<1x256xi32> to vector<1x239xi32>
    %c15_i32_6 = arith.constant 15 : i32
    %46 = vector.broadcast %c15_i32_6 : i32 to vector<1x239xi32>
    %47 = arith.cmpi ne, %45, %46 : vector<1x239xi32>
    %cst_7 = arith.constant 0.000000e+00 : f32
    %48 = vector.shape_cast %47 : vector<1x239xi1> to vector<1x239xi1>
    %49 = vector.broadcast %48 : vector<1x239xi1> to vector<8x239xi1>
    %50 = vector.broadcast %cst_7 : f32 to vector<8x239xf32>
    %51 = arith.select %49, %44, %50 : vector<8x239xi1>, vector<8x239xf32>
    %52 = arith.mulf %51, %51 : vector<8x239xf32>
    %53 = vector.shape_cast %52 : vector<8x239xf32> to vector<1x8x239xf32>
    %cst_8 = arith.constant dense<0.000000e+00> : vector<1xf32>
    %54 = vector.multi_reduction <add>, %53, %cst_8 [1, 2] : vector<1x8x239xf32> to vector<1xf32>
    %55 = vector.shape_cast %54 : vector<1xf32> to vector<1x1x1xf32>
    %56 = vector.extract %55[0, 0, 0] : f32 from vector<1x1x1xf32>
    %57 = arith.addf %41, %56 : f32
    %58 = vector.extract_strided_slice %0 {offsets = [0, 15], sizes = [8, 241], strides = [1, 1]} : vector<8x256xf32> to vector<8x241xf32>
    %59 = vector.extract_strided_slice %0 {offsets = [0, 0], sizes = [8, 241], strides = [1, 1]} : vector<8x256xf32> to vector<8x241xf32>
    %60 = arith.subf %58, %59 : vector<8x241xf32>
    %61 = vector.extract_strided_slice %17 {offsets = [0, 0], sizes = [1, 241], strides = [1, 1]} : vector<1x256xi32> to vector<1x241xi32>
    %c0_i32_9 = arith.constant 0 : i32
    %62 = vector.broadcast %c0_i32_9 : i32 to vector<1x241xi32>
    %63 = arith.cmpi ne, %61, %62 : vector<1x241xi32>
    %cst_10 = arith.constant 0.000000e+00 : f32
    %64 = vector.shape_cast %63 : vector<1x241xi1> to vector<1x241xi1>
    %65 = vector.broadcast %64 : vector<1x241xi1> to vector<8x241xi1>
    %66 = vector.broadcast %cst_10 : f32 to vector<8x241xf32>
    %67 = arith.select %65, %60, %66 : vector<8x241xi1>, vector<8x241xf32>
    %68 = arith.mulf %67, %67 : vector<8x241xf32>
    %69 = vector.shape_cast %68 : vector<8x241xf32> to vector<1x8x241xf32>
    %cst_11 = arith.constant dense<0.000000e+00> : vector<1xf32>
    %70 = vector.multi_reduction <add>, %69, %cst_11 [1, 2] : vector<1x8x241xf32> to vector<1xf32>
    %71 = vector.shape_cast %70 : vector<1xf32> to vector<1x1x1xf32>
    %72 = vector.extract %71[0, 0, 0] : f32 from vector<1x1x1xf32>
    %73 = arith.addf %57, %72 : f32
    %cst_12 = arith.constant 2.000000e+00 : f32
    %74 = arith.mulf %cst_12, %73 : f32
    %c0_13 = arith.constant 0 : index
    %c0_14 = arith.constant 0 : index
    %75 = memref.load %arg2[%c0_13, %c0_14] : memref<1x1xf32, #tpu.memory_space<smem>>
    memref.store %74, %arg2[%c0_13, %c0_14] : memref<1x1xf32, #tpu.memory_space<smem>>
    return
  }
  func.func @transform_0(%arg0: i32) -> (i32, i32) {
    %c0_i32 = arith.constant 0 : i32
    %c0_i32_0 = arith.constant 0 : i32
    return %arg0, %c0_i32 : i32, i32
  }
  func.func @transform_1(%arg0: i32) -> (i32, i32) {
    %c0_i32 = arith.constant 0 : i32
    %c0_i32_0 = arith.constant 0 : i32
    return %arg0, %c0_i32 : i32, i32
  }
}

</mosaic_0001>

<llo_original>
// kernel: tpu_custom_call.1
$region0: #{tpu_custom_call.1}
  #allocation0 [shape = 'u32[]', space=smem, size = 0x4, offset = 0x4, fixed_abs, tag = 'smem constant byte address 0x4 - core index']
  #allocation1 [shape = 'u32[144,128]{1,0:T(1,128)}', space=vmem, size = 0x12000, scoped, tag = 'internal scratch']
  %s0 = inlined_call_operand.hbm [shape: f32[8,256], index: 0, kind: input, shape index: {}]
  %s1 = inlined_call_operand.hbm [shape: f32[1,1], index: 1, kind: output, shape index: {}]
  %s2 = sld [smem:[#allocation0]]
  $region18: #{tpu_custom_call.1} parent=0
    _
  %s4 = ssub.s32 1, %s2
  %s5 = scalar_select 0, %s4, %s2
  $region1: #{tpu_custom_call.1} parent=0
    #allocation2 [shape = 'u8[8192]{0}', space=vmem, size = 0x2000, scoped, tag = 'input window, operand 0, single buffered']
    #allocation3 [shape = 's32[1]{0}', space=sflag, size = 0x4, scoped, tag = 'scoped memory for tpu_custom_call.1']
    #allocation4 [shape = 's32[1]{0}', space=sflag, size = 0x4, scoped, tag = 'scoped memory for tpu_custom_call.1']
    #allocation5 [shape = 'u8[512]{0}', space=smem, size = 0x200, scoped, tag = 'output window, operand 0, single buffered']
    %6 = vsyncpa [#allocation3], 0
    %7 = vsyncpa [#allocation4], 0
    // Predicated region
    $region2: #{tpu_custom_call.1} parent=1 // pred_check
      _
    $region3: #{tpu_custom_call.1} parent=1 // pred_check_branch
      %9 = sbr.rel (0) target = $region5
    $region4: #{tpu_custom_call.1} parent=1 // pred_region
      %s11 = ssub.s32 256, 256
      %12 = vsyncadd [#allocation3], %s11
      %s14 = sshll.u32 [#allocation2], 4
      %s15 = int_to_ptr.vmem [resolvable:$true] %s14
      %17 = dma.hbm_to_vmem [thread:$0]  %s0, 256, %s15, [#allocation3]
    $region5: #{tpu_custom_call.1} parent=1 // pred_fallthru
      _
    // Predicated region
    $region6: #{tpu_custom_call.1} parent=1 // pred_check
      _
    $region7: #{tpu_custom_call.1} parent=1 // pred_check_branch
      %19 = sbr.rel (0) target = $region9
    $region8: #{tpu_custom_call.1} parent=1 // pred_region
      %20 = dma.done [#allocation3], 256
    $region9: #{tpu_custom_call.1} parent=1 // pred_fallthru
      _
    %v21 = vld [vmem:[#allocation2] sm:$0xff]
    %v22 = vld [vmem:[#allocation2 + $0x8] sm:$0xff]
    %v23 = vlaneseq
    %v24 = vand.u32 %v23, 127
    %v25 = vadd.s32 %v24, 128
    %vm26 = vcmp.lt.s32.totalorder %v24, 0
    %v27 = vsub.s32 0, %v24
    %v28 = vsel %vm26, %v27, %v24
    %v29 = vshrl.u32 %v28, 4
    %v30 = vand.u32 %v28, 15
    %v31 = vsub.s32 0, %v30
    %v32 = vsel %vm26, %v31, %v30
    %vm33 = vcmp.lt.s32.totalorder %v25, 0
    %v34 = vsub.s32 0, %v25
    %v35 = vsel %vm33, %v34, %v25
    %v36 = vshrl.u32 %v35, 4
    %v37 = vand.u32 %v35, 15
    %v38 = vsub.s32 0, %v37
    %v39 = vsel %vm33, %v38, %v37
    %vm40 = vcmp.ne.s32.totalorder %v32, 0
    %vm41 = vcmp.ne.s32.totalorder %v39, 0
    %vm42 = vcmp.lt.s32.totalorder %v32, 0
    %vm43 = vcmp.lt.s32.totalorder %v39, 0
    %vm44 = vmand %vm42, %vm40
    %vm45 = vmand %vm43, %vm41
    %v46 = vadd.s32 %v32, 16
    %v47 = vadd.s32 %v39, 16
    %v48 = vsel %vm44, %v46, %v32
    %v49 = vsel %vm45, %v47, %v39
    %52 = vrot.lane.b32.xlu0 %v21, 16
    %v53 = vpop.permute.xlu0 %52
    %54 = vrot.lane.b32.xlu0 %v22, 16
    %v55 = vpop.permute.xlu0 %54
    %vm56 = vcmask 130048
    %v57 = vsel %vm56, %v53, %v55
    %v60 = vsub.f32 %v21, %v53
    %v61 = vsub.f32 %v22, %v57
    %v62 = vmul.f32 %v60, %v60
    %v63 = vmul.f32 %v61, %v61
    %66 = vrot.lane.b32.xlu0 %v62, 112
    %v67 = vpop.permute.xlu0 %66
    %68 = vrot.lane.b32.xlu0 %v63, 112
    %v69 = vpop.permute.xlu0 %68
    %vm70 = vcmask 916480
    %v71 = vsel %vm70, %v67, %v69
    %v74 = vsel %vm70, %v69, 0.0
    %v75 = vadd.f32 %v71, %v74
    %76 = vadd.xlane.f32.xlu0 %v75
    %v77 = vpop.xlane.xlu0 %76
    %v78 = vrot.slane %v77, 4
    %v79 = vadd.f32 %v77, %v78
    %v80 = vrot.slane %v79, 2
    %v81 = vadd.f32 %v79, %v80
    %v82 = vrot.slane %v81, 1
    %v83 = vadd.f32 %v81, %v82
    %s84 = vtos %v83
    %85 = vrot.lane.b32.xlu0 %v21, 1
    %v86 = vpop.permute.xlu0 %85
    %87 = vrot.lane.b32.xlu0 %v22, 1
    %v88 = vpop.permute.xlu0 %87
    %vm89 = vcmask 7168
    %v90 = vsel %vm89, %v86, %v88
    %v93 = vsub.f32 %v21, %v86
    %v94 = vsub.f32 %v22, %v90
    %vm95 = vcmp.ne.s32.totalorder %v48, 15
    %vm96 = vcmp.ne.s32.totalorder %v49, 15
    %v97 = vsel %vm95, 1, 0
    %v98 = vsel %vm96, 1, 0
    %vm99 = vcmp.eq.s32.totalorder %v97, 1
    %vm100 = vcmp.eq.s32.totalorder %v98, 1
    %103 = vrot.lane.b32.xlu0 %v93, 127
    %v104 = vpop.permute.xlu0 %103
    %105 = vrot.lane.b32.xlu0 %v94, 127
    %v106 = vpop.permute.xlu0 %105
    %vm107 = vcmask 1039360
    %v108 = vsel %vm107, %v104, %v106
    %v111 = vsel %vm99, %v108, 0.0
    %v112 = vsel %vm100, %v106, 0.0
    %v113 = vmul.f32 %v111, %v111
    %v114 = vmul.f32 %v112, %v112
    %v115 = vsel %vm107, %v114, 0.0
    %v116 = vadd.f32 %v113, %v115
    %117 = vadd.xlane.f32.xlu0 %v116
    %v118 = vpop.xlane.xlu0 %117
    %v119 = vrot.slane %v118, 4
    %v120 = vadd.f32 %v118, %v119
    %v121 = vrot.slane %v120, 2
    %v122 = vadd.f32 %v120, %v121
    %v123 = vrot.slane %v122, 1
    %v124 = vadd.f32 %v122, %v123
    %s125 = vtos %v124
    %s126 = sadd.f32 %s84, %s125
    %127 = vrot.lane.b32.xlu0 %v21, 17
    %v128 = vpop.permute.xlu0 %127
    %129 = vrot.lane.b32.xlu0 %v22, 17
    %v130 = vpop.permute.xlu0 %129
    %vm131 = vcmask 138240
    %v132 = vsel %vm131, %v128, %v130
    %v135 = vsub.f32 %v21, %v128
    %v136 = vsub.f32 %v22, %v132
    %139 = vrot.lane.b32.xlu0 %v135, 111
    %v140 = vpop.permute.xlu0 %139
    %141 = vrot.lane.b32.xlu0 %v136, 111
    %v142 = vpop.permute.xlu0 %141
    %vm143 = vcmask 908288
    %v144 = vsel %vm143, %v140, %v142
    %v147 = vsel %vm99, %v144, 0.0
    %v148 = vsel %vm100, %v142, 0.0
    %v149 = vmul.f32 %v147, %v147
    %v150 = vmul.f32 %v148, %v148
    %v151 = vsel %vm143, %v150, 0.0
    %v152 = vadd.f32 %v149, %v151
    %153 = vadd.xlane.f32.xlu0 %v152
    %v154 = vpop.xlane.xlu0 %153
    %v155 = vrot.slane %v154, 4
    %v156 = vadd.f32 %v154, %v155
    %v157 = vrot.slane %v156, 2
    %v158 = vadd.f32 %v156, %v157
    %v159 = vrot.slane %v158, 1
    %v160 = vadd.f32 %v158, %v159
    %s161 = vtos %v160
    %s162 = sadd.f32 %s126, %s161
    %163 = vrot.lane.b32.xlu0 %v21, 15
    %v164 = vpop.permute.xlu0 %163
    %165 = vrot.lane.b32.xlu0 %v22, 15
    %v166 = vpop.permute.xlu0 %165
    %vm167 = vcmask 121856
    %v168 = vsel %vm167, %v164, %v166
    %v171 = vsub.f32 %v21, %v164
    %v172 = vsub.f32 %v22, %v168
    %vm173 = vcmp.ne.s32.totalorder %v48, 0
    %vm174 = vcmp.ne.s32.totalorder %v49, 0
    %v175 = vsel %vm173, 1, 0
    %v176 = vsel %vm174, 1, 0
    %vm177 = vcmp.eq.s32.totalorder %v175, 1
    %vm178 = vcmp.eq.s32.totalorder %v176, 1
    %181 = vrot.lane.b32.xlu0 %v171, 113
    %v182 = vpop.permute.xlu0 %181
    %183 = vrot.lane.b32.xlu0 %v172, 113
    %v184 = vpop.permute.xlu0 %183
    %vm185 = vcmask 924672
    %v186 = vsel %vm185, %v182, %v184
    %v189 = vsel %vm177, %v186, 0.0
    %v190 = vsel %vm178, %v184, 0.0
    %v191 = vmul.f32 %v189, %v189
    %v192 = vmul.f32 %v190, %v190
    %v193 = vsel %vm185, %v192, 0.0
    %v194 = vadd.f32 %v191, %v193
    %195 = vadd.xlane.f32.xlu0 %v194
    %v196 = vpop.xlane.xlu0 %195
    %v197 = vrot.slane %v196, 4
    %v198 = vadd.f32 %v196, %v197
    %v199 = vrot.slane %v198, 2
    %v200 = vadd.f32 %v198, %v199
    %v201 = vrot.slane %v200, 1
    %v202 = vadd.f32 %v200, %v201
    %s203 = vtos %v202
    %s204 = sadd.f32 %s162, %s203
    %s205 = smul.f32 %s204, 2.0
    %s206 = scalar_lea.smem [#allocation5], 0
    %207 = sst [smem:[%s206]] %s205
    // Predicated region
    $region10: #{tpu_custom_call.1} parent=1 // pred_check
      _
    $region11: #{tpu_custom_call.1} parent=1 // pred_check_branch
      %209 = sbr.rel (0) target = $region13
    $region12: #{tpu_custom_call.1} parent=1 // pred_region
      %s211 = ssub.s32 16, 16
      %212 = vsyncadd [#allocation4], %s211
      %215 = dma.smem_to_hbm [#allocation5], 16, %s1, [#allocation4]
    $region13: #{tpu_custom_call.1} parent=1 // pred_fallthru
      _
    // Predicated region
    $region14: #{tpu_custom_call.1} parent=1 // pred_check
      _
    $region15: #{tpu_custom_call.1} parent=1 // pred_check_branch
      %217 = sbr.rel (0) target = $region17
    $region16: #{tpu_custom_call.1} parent=1 // pred_region
      %218 = dma.done [#allocation4], 16
    $region17: #{tpu_custom_call.1} parent=1 // pred_fallthru
      _
    %219 = sfence
    %220 = vsyncpa [#allocation3], 1
    %221 = vsyncpa [#allocation4], 1

</llo_original>
